<compile_context>
chip_gen: v7x
topology: tpu7x:2x2x1
jax: 0.10.0
libtpu: 0.0.40
codegen_flags: <defaults>
</compile_context>

<pallas_src>
import functools

import numpy as np

import jax
import jax.numpy as jnp
from jax.experimental import pallas as pl
from jax.experimental.pallas import tpu as pltpu

_LANES = 128
_SUBLANES = 8
_ROW_ALIGN = 32      # int8 sublane packing (covers bf16=16 / f32=8 too)
_BIG = 1e9           # sentinel cutpoint: 1/(1+exp(x-BIG))==1, 1/(1+exp(x+BIG))==0 in f32


def _round_up(x, m):
    return (x + m - 1) // m * m


def _default_n_splits():
    # A 2-way "parallel" leading grid axis only pays off on dual-TensorCore
    # chips (v4 / v5p megacore, v7x).  On single-core v5e / v6e it just adds a
    # fully padded block plus a duplicated zero-init / finalize.
    try:
        kind = jax.devices()[0].device_kind.lower()
    except Exception:
        return 1
    if ("v4" in kind) or ("v5p" in kind) or ("v7" in kind):
        return 2
    return 1


# ----------------------------------------------------------------------------
# Kernel
# ----------------------------------------------------------------------------
def _ordinal_kernel(ext_cut_ref,            # SMEM scalar-prefetch: (num_class+1,) f32
                    pred_ref, label_ref,    # VMEM blocks: (blk_rows, 128)
                    out_ref,                # VMEM block:  (8, 128) per split
                    acc_ref,                # VMEM scratch: (blk_rows, 128) f32
                    *, n_valid, neg_inv_n, num_class,
                    fast_path, cut0, cut_step):
    i = pl.program_id(1)
    n_inner = pl.num_programs(1)
    blk_rows, lanes = acc_ref.shape

    @pl.when(i == 0)
    def _():
        acc_ref[...] = jnp.zeros_like(acc_ref)

    pred = pred_ref[...].astype(jnp.float32)   # cast in-kernel (inputs may be bf16)

    if fast_path:
        # Equispaced cutpoints: cut[k] = cut0 + k*cut_step.  Bracketing values
        # for class k come straight from arithmetic on the label:
        #   hi = cut[k]   (or +BIG for the last class)
        #   lo = cut[k-1] (or -BIG for class 0)
        labf = label_ref[...].astype(jnp.float32)
        prod = labf * cut_step
        hi = jnp.where(labf == float(num_class - 1), _BIG, prod + cut0)
        lo = jnp.where(labf == 0.0, -_BIG, prod + (cut0 - cut_step))
    else:
        # Arbitrary cutpoints: static select loop over the small class count,
        # reading the extended table [-BIG, cutpoints..., +BIG] from SMEM.
        lab = label_ref[...].astype(jnp.int32)
        lo = jnp.zeros_like(pred)
        hi = jnp.zeros_like(pred)
        for k in range(num_class):
            is_k = lab == k
            lo = jnp.where(is_k, ext_cut_ref[k], lo)
            hi = jnp.where(is_k, ext_cut_ref[k + 1], hi)

    # link(class k) = sigmoid(hi - pred) - sigmoid(lo - pred); exact divide form
    # keeps bit-parity with the reference (the ±BIG sentinels saturate to 1/0).
    sig_hi = 1.0 / (1.0 + jnp.exp(pred - hi))
    sig_lo = 1.0 / (1.0 + jnp.exp(pred - lo))
    eps = 1e-15
    ll = jnp.log(jnp.clip(sig_hi - sig_lo, eps, 1.0 - eps))

    # Accumulate.  The padding mask is only materialized for the single block
    # that straddles n_valid; fully padded blocks skip the accumulate.
    # (n_valid < 2^31 asserted in the wrapper so int32 index math is safe.)
    blk_elems = blk_rows * lanes
    blk = pl.program_id(0) * n_inner + i
    blk_start = blk * blk_elems

    @pl.when(blk_start + blk_elems <= n_valid)
    def _():                                   # fully valid block
        acc_ref[...] += ll

    @pl.when(jnp.logical_and(blk_start < n_valid, n_valid < blk_start + blk_elems))
    def _():                                   # block straddling n_valid
        rem = n_valid - blk_start
        row = jax.lax.broadcasted_iota(jnp.int32, (blk_rows, lanes), 0)
        lane = jax.lax.broadcasted_iota(jnp.int32, (blk_rows, lanes), 1)
        local = row * lanes + lane
        acc_ref[...] += jnp.where(local < rem, ll, 0.0)

    # Finalize this split: one cross-lane reduce, scale by -1/N, park the scalar
    # at [0, 0] of this split's output block so a tiny host-side jnp.sum over
    # the lane-dense output recovers the loss.
    @pl.when(i == n_inner - 1)
    def _():
        total = jnp.sum(acc_ref[...]) * neg_inv_n
        r = jax.lax.broadcasted_iota(jnp.int32, out_ref.shape, 0)
        c = jax.lax.broadcasted_iota(jnp.int32, out_ref.shape, 1)
        out_ref[...] = jnp.where((r == 0) & (c == 0), total, 0.0)


# ----------------------------------------------------------------------------
# pallas_call wrapper
# ----------------------------------------------------------------------------
def ordinal_regression_loss(pred, label, cutpoints, *, n_splits=None,
                            max_block_rows=2048):
    pred = pred.reshape(-1)
    label = label.reshape(-1)
    n = int(pred.shape[0])
    assert 1 <= n < 2**31, "element count must fit in int32 index math"
    num_class = int(cutpoints.shape[0]) + 1

    # Shrink the label HBM stream: int8 when the class count allows it.
    if num_class <= 127:
        label = label.astype(jnp.int8)
    else:
        label = label.astype(jnp.int32)

    cutf = cutpoints.astype(jnp.float32)
    ext_cut = jnp.concatenate([
        jnp.full((1,), -_BIG, jnp.float32),
        cutf,
        jnp.full((1,), _BIG, jnp.float32),
    ])

    # Equispaced-cutpoint fast path (the default module formula always hits it).
    fast_path, cut0, cut_step = False, 0.0, 0.0
    try:
        cnp = np.asarray(jax.device_get(cutf), dtype=np.float64)
        if cnp.ndim == 1 and cnp.size >= 1:
            c0 = float(cnp[0])
            d = float(cnp[1] - cnp[0]) if cnp.size > 1 else 0.0
            tol = 1e-5 * max(1.0, float(np.max(np.abs(cnp))))
            if np.allclose(cnp, c0 + d * np.arange(cnp.size), rtol=0.0, atol=tol):
                fast_path, cut0, cut_step = True, c0, d
    except Exception:
        fast_path = False   # traced / non-concrete cutpoints -> SMEM select loop

    if n_splits is None:
        n_splits = _default_n_splits()
    n_splits = max(1, int(n_splits))

    # Lane-dense tiling: (rows, 128), row blocks rounded for int8 packing.
    rows = _round_up(max(1, pl.cdiv(n, _LANES)), _ROW_ALIGN)
    blk_rows = min(_round_up(int(max_block_rows), _ROW_ALIGN), rows)
    total_blocks = _round_up(pl.cdiv(rows, blk_rows), n_splits)
    inner = total_blocks // n_splits
    rows_pad = total_blocks * blk_rows
    n_pad = rows_pad * _LANES

    if n_pad != n:
        pred = jnp.pad(pred, (0, n_pad - n))
        label = jnp.pad(label, (0, n_pad - n))
    pred2 = pred.reshape(rows_pad, _LANES)      # keep native dtype; cast in-kernel
    label2 = label.reshape(rows_pad, _LANES)

    kernel = functools.partial(
        _ordinal_kernel,
        n_valid=n,
        neg_inv_n=-1.0 / float(n),
        num_class=num_class,
        fast_path=fast_path,
        cut0=cut0,
        cut_step=cut_step,
    )

    out = pl.pallas_call(
        kernel,
        out_shape=jax.ShapeDtypeStruct((n_splits * _SUBLANES, _LANES), jnp.float32),
        grid_spec=pltpu.PrefetchScalarGridSpec(
            num_scalar_prefetch=1,
            grid=(n_splits, inner),
            in_specs=[
                pl.BlockSpec((blk_rows, _LANES),
                             lambda s, i, cut: (s * inner + i, 0)),
                pl.BlockSpec((blk_rows, _LANES),
                             lambda s, i, cut: (s * inner + i, 0)),
            ],
            out_specs=pl.BlockSpec((_SUBLANES, _LANES),
                                   lambda s, i, cut: (s, 0)),
            scratch_shapes=[pltpu.VMEM((blk_rows, _LANES), jnp.float32)],
        ),
        compiler_params=pltpu.CompilerParams(
            dimension_semantics=("parallel", "arbitrary"),
            vmem_limit_bytes=32 * 1024 * 1024,
        ),
    )(ext_cut, pred2, label2)

    # Tiny host-side combine of the per-split partial sums (already scaled by -1/N).
    return jnp.sum(out)


# ----------------------------------------------------------------------------
# Module equivalent
# ----------------------------------------------------------------------------
class OrdinalRegressionLoss:
    """Forward-pass port of the PyTorch OrdinalRegressionLoss module."""

    def __init__(self, num_class=8, train_cutpoints=False, scale=20.0):
        self.num_classes = num_class
        num_cutpoints = num_class - 1
        self.cutpoints = (jnp.arange(num_cutpoints, dtype=jnp.float32)
                          * scale / (num_class - 2) - scale / 2)
        # TODO(synk): gradient flow into cutpoints (train_cutpoints=True) is not
        # implemented in this forward-only port.
        self.train_cutpoints = train_cutpoints

    def __call__(self, pred, label):
        if label is None:
            return jnp.float32(0.0)
        return ordinal_regression_loss(pred, label, self.cutpoints)


# ----------------------------------------------------------------------------
# Pure-JAX reference (mirrors the PyTorch forward op-for-op)
# ----------------------------------------------------------------------------
def _reference_loss(pred, label, cutpoints):
    pred = pred.astype(jnp.float32).reshape(-1, 1)
    sig = 1.0 / (1.0 + jnp.exp(-(cutpoints[None, :].astype(jnp.float32) - pred)))
    link = jnp.concatenate(
        [sig[:, :1], sig[:, 1:] - sig[:, :-1], 1.0 - sig[:, -1:]], axis=1)
    like = jnp.clip(link, 1e-15, 1.0 - 1e-15)
    ll = jnp.log(like)
    picked = jnp.take_along_axis(ll, label.reshape(-1, 1).astype(jnp.int32), axis=1)
    return -jnp.mean(picked)


# ----------------------------------------------------------------------------
# Demo / smoke test
# ----------------------------------------------------------------------------
if __name__ == "__main__":
    key = jax.random.PRNGKey(0)
    k = jax.random.split(key, 6)
    ok = True

    # Case 1: defaults (num_class=8, scale=20), f32 predictions, N=64
    # (equispaced fast path, single straddling block).
    N1, C1 = 64, 8
    pred1 = jax.random.uniform(k[0], (N1,), jnp.float32, -12.0, 12.0)
    label1 = jax.random.randint(k[1], (N1,), 0, C1)
    mod1 = OrdinalRegressionLoss(num_class=C1)
    loss1 = jax.block_until_ready(mod1(pred1, label1))
    ref1 = _reference_loss(pred1, label1, mod1.cutpoints)
    ok &= bool(jnp.allclose(loss1, ref1, atol=1e-5, rtol=1e-4))

    # Case 2: num_class=5, scale=10, bf16 predictions, N not a multiple of 128
    # (padding/masking, in-kernel bf16 cast, int8 labels).
    N2, C2 = 200, 5
    pred2 = jax.random.uniform(k[2], (N2,), jnp.float32, -8.0, 8.0).astype(jnp.bfloat16)
    label2 = jax.random.randint(k[3], (N2,), 0, C2)
    mod2 = OrdinalRegressionLoss(num_class=C2, scale=10.0)
    loss2 = jax.block_until_ready(mod2(pred2, label2))
    ref2 = _reference_loss(pred2, label2, mod2.cutpoints)
    ok &= bool(jnp.allclose(loss2, ref2, atol=1e-5, rtol=1e-4))

    # Case 3: non-equispaced cutpoints -> exercises the SMEM select-loop fallback.
    N3 = 300
    cut3 = jnp.array([-4.0, -1.0, 1.5, 5.0], jnp.float32)      # num_class = 5
    pred3 = jax.random.uniform(k[4], (N3,), jnp.float32, -7.0, 7.0)
    label3 = jax.random.randint(k[5], (N3,), 0, int(cut3.shape[0]) + 1)
    loss3 = jax.block_until_ready(ordinal_regression_loss(pred3, label3, cut3))
    ref3 = _reference_loss(pred3, label3, cut3)
    ok &= bool(jnp.allclose(loss3, ref3, atol=1e-5, rtol=1e-4))

    if ok:
        print("KERNEL_OK")
    else:
        print("MISMATCH",
              float(loss1), float(ref1),
              float(loss2), float(ref2),
              float(loss3), float(ref3))
</pallas_src>

<mosaic_0001>
module attributes {stable_mosaic.version = 11 : i64} {
  func.func @_ordinal_kernel(%arg0: i32, %arg1: i32, %arg2: memref<9xf32, #tpu.memory_space<smem>>, %arg3: memref<32x128xf32, #tpu.memory_space<vmem>>, %arg4: memref<32x128xi8, #tpu.memory_space<vmem>>, %arg5: memref<8x128xf32, #tpu.memory_space<vmem>>, %arg6: memref<32x128xf32, #tpu.memory_space<vmem>>) attributes {dimension_semantics = [#tpu.dimension_semantics<parallel>, #tpu.dimension_semantics<arbitrary>], iteration_bounds = array<i64: 1, 1>, scalar_prefetch = 1 : i64, scratch_operands = 1 : i64, tpu.core_type = #tpu.core_type<tc>, window_params = [{transform_indices = @transform_0, window_bounds = array<i64: 32, 128>}, {transform_indices = @transform_1, window_bounds = array<i64: 32, 128>}, {transform_indices = @transform_2, window_bounds = array<i64: 8, 128>}]} {
    %c0_i32 = arith.constant 0 : i32
    %0 = arith.cmpi eq, %arg1, %c0_i32 : i32
    %1 = arith.extui %0 : i1 to i32
    %c0_i32_0 = arith.constant 0 : i32
    %2 = arith.cmpi ne, %1, %c0_i32_0 : i32
    scf.if %2 {
      %cst_24 = arith.constant 0.000000e+00 : f32
      %54 = vector.broadcast %cst_24 : f32 to vector<32x128xf32>
      %c0_25 = arith.constant 0 : index
      %c0_26 = arith.constant 0 : index
      %55 = vector.load %arg6[%c0_25, %c0_26] : memref<32x128xf32, #tpu.memory_space<vmem>>, vector<32x128xf32>
      tpu.vector_store %arg6[%c0_25, %c0_26], %54 {strides = array<i32>} : memref<32x128xf32, #tpu.memory_space<vmem>>, vector<32x128xf32>,
    } else {
    }
    %c0 = arith.constant 0 : index
    %c0_1 = arith.constant 0 : index
    %3 = vector.load %arg3[%c0, %c0_1] : memref<32x128xf32, #tpu.memory_space<vmem>>, vector<32x128xf32>
    %c0_2 = arith.constant 0 : index
    %c0_3 = arith.constant 0 : index
    %4 = vector.load %arg4[%c0_2, %c0_3] : memref<32x128xi8, #tpu.memory_space<vmem>>, vector<32x128xi8>
    %5 = arith.sitofp %4 : vector<32x128xi8> to vector<32x128xf32>
    %cst = arith.constant 3.33333302 : f32
    %6 = vector.broadcast %cst : f32 to vector<32x128xf32>
    %7 = arith.mulf %5, %6 : vector<32x128xf32>
    %cst_4 = arith.constant 7.000000e+00 : f32
    %8 = vector.broadcast %cst_4 : f32 to vector<32x128xf32>
    %9 = arith.cmpf oeq, %5, %8 : vector<32x128xf32>
    %cst_5 = arith.constant -1.000000e+01 : f32
    %10 = vector.broadcast %cst_5 : f32 to vector<32x128xf32>
    %11 = arith.addf %7, %10 : vector<32x128xf32>
    %cst_6 = arith.constant 1.000000e+09 : f32
    %12 = vector.broadcast %cst_6 : f32 to vector<32x128xf32>
    %13 = arith.select %9, %12, %11 : vector<32x128xi1>, vector<32x128xf32>
    %cst_7 = arith.constant 0.000000e+00 : f32
    %14 = vector.broadcast %cst_7 : f32 to vector<32x128xf32>
    %15 = arith.cmpf oeq, %5, %14 : vector<32x128xf32>
    %cst_8 = arith.constant -13.333333 : f32
    %16 = vector.broadcast %cst_8 : f32 to vector<32x128xf32>
    %17 = arith.addf %7, %16 : vector<32x128xf32>
    %cst_9 = arith.constant -1.000000e+09 : f32
    %18 = vector.broadcast %cst_9 : f32 to vector<32x128xf32>
    %19 = arith.select %15, %18, %17 : vector<32x128xi1>, vector<32x128xf32>
    %20 = arith.subf %3, %13 : vector<32x128xf32>
    %21 = math.exp %20 : vector<32x128xf32>
    %cst_10 = arith.constant 1.000000e+00 : f32
    %22 = vector.broadcast %cst_10 : f32 to vector<32x128xf32>
    %23 = arith.addf %22, %21 : vector<32x128xf32>
    %cst_11 = arith.constant 1.000000e+00 : f32
    %24 = vector.broadcast %cst_11 : f32 to vector<32x128xf32>
    %25 = arith.divf %24, %23 : vector<32x128xf32>
    %26 = arith.subf %3, %19 : vector<32x128xf32>
    %27 = math.exp %26 : vector<32x128xf32>
    %cst_12 = arith.constant 1.000000e+00 : f32
    %28 = vector.broadcast %cst_12 : f32 to vector<32x128xf32>
    %29 = arith.addf %28, %27 : vector<32x128xf32>
    %cst_13 = arith.constant 1.000000e+00 : f32
    %30 = vector.broadcast %cst_13 : f32 to vector<32x128xf32>
    %31 = arith.divf %30, %29 : vector<32x128xf32>
    %32 = arith.subf %25, %31 : vector<32x128xf32>
    %cst_14 = arith.constant 1.000000e-15 : f32
    %cst_15 = arith.constant 1.000000e+00 : f32
    %33 = vector.broadcast %cst_14 : f32 to vector<32x128xf32>
    %34 = arith.maximumf %33, %32 : vector<32x128xf32>
    %35 = vector.broadcast %cst_15 : f32 to vector<32x128xf32>
    %36 = arith.minimumf %35, %34 : vector<32x128xf32>
    %37 = math.log %36 : vector<32x128xf32>
    %c1_i32 = arith.constant 1 : i32
    %38 = arith.muli %arg0, %c1_i32 : i32
    %39 = arith.addi %38, %arg1 : i32
    %c4096_i32 = arith.constant 4096 : i32
    %40 = arith.muli %39, %c4096_i32 : i32
    %c4096_i32_16 = arith.constant 4096 : i32
    %41 = arith.addi %40, %c4096_i32_16 : i32
    %c64_i32 = arith.constant 64 : i32
    %42 = arith.cmpi sle, %41, %c64_i32 : i32
    %43 = arith.extui %42 : i1 to i32
    %c0_i32_17 = arith.constant 0 : i32
    %44 = arith.cmpi ne, %43, %c0_i32_17 : i32
    scf.if %44 {
      %c0_24 = arith.constant 0 : index
      %c0_25 = arith.constant 0 : index
      %54 = vector.load %arg6[%c0_24, %c0_25] : memref<32x128xf32, #tpu.memory_space<vmem>>, vector<32x128xf32>
      %55 = arith.addf %54, %37 : vector<32x128xf32>
      %c0_26 = arith.constant 0 : index
      %c0_27 = arith.constant 0 : index
      %56 = vector.load %arg6[%c0_26, %c0_27] : memref<32x128xf32, #tpu.memory_space<vmem>>, vector<32x128xf32>
      tpu.vector_store %arg6[%c0_26, %c0_27], %55 {strides = array<i32>} : memref<32x128xf32, #tpu.memory_space<vmem>>, vector<32x128xf32>,
    } else {
    }
    %c64_i32_18 = arith.constant 64 : i32
    %45 = arith.cmpi slt, %40, %c64_i32_18 : i32
    %c4096_i32_19 = arith.constant 4096 : i32
    %46 = arith.addi %40, %c4096_i32_19 : i32
    %c64_i32_20 = arith.constant 64 : i32
    %47 = arith.cmpi sgt, %46, %c64_i32_20 : i32
    %48 = arith.andi %45, %47 : i1
    %49 = arith.extui %48 : i1 to i32
    %c0_i32_21 = arith.constant 0 : i32
    %50 = arith.cmpi ne, %49, %c0_i32_21 : i32
    scf.if %50 {
      %c64_i32_24 = arith.constant 64 : i32
      %54 = arith.subi %c64_i32_24, %40 : i32
      %55 = tpu.iota {dimensions = array<i32: 0>} : vector<32x128xi32>
      %56 = tpu.iota {dimensions = array<i32: 1>} : vector<32x128xi32>
      %c128_i32 = arith.constant 128 : i32
      %57 = vector.broadcast %c128_i32 : i32 to vector<32x128xi32>
      %58 = arith.muli %55, %57 : vector<32x128xi32>
      %59 = arith.addi %58, %56 : vector<32x128xi32>
      %c0_25 = arith.constant 0 : index
      %c0_26 = arith.constant 0 : index
      %60 = vector.load %arg6[%c0_25, %c0_26] : memref<32x128xf32, #tpu.memory_space<vmem>>, vector<32x128xf32>
      %61 = vector.broadcast %54 : i32 to vector<32x128xi32>
      %62 = arith.cmpi slt, %59, %61 : vector<32x128xi32>
      %cst_27 = arith.constant 0.000000e+00 : f32
      %63 = vector.broadcast %cst_27 : f32 to vector<32x128xf32>
      %64 = arith.select %62, %37, %63 : vector<32x128xi1>, vector<32x128xf32>
      %65 = arith.addf %60, %64 : vector<32x128xf32>
      %c0_28 = arith.constant 0 : index
      %c0_29 = arith.constant 0 : index
      %66 = vector.load %arg6[%c0_28, %c0_29] : memref<32x128xf32, #tpu.memory_space<vmem>>, vector<32x128xf32>
      tpu.vector_store %arg6[%c0_28, %c0_29], %65 {strides = array<i32>} : memref<32x128xf32, #tpu.memory_space<vmem>>, vector<32x128xf32>,
    } else {
    }
    %c0_i32_22 = arith.constant 0 : i32
    %51 = arith.cmpi eq, %arg1, %c0_i32_22 : i32
    %52 = arith.extui %51 : i1 to i32
    %c0_i32_23 = arith.constant 0 : i32
    %53 = arith.cmpi ne, %52, %c0_i32_23 : i32
    scf.if %53 {
      %c0_24 = arith.constant 0 : index
      %c0_25 = arith.constant 0 : index
      %54 = vector.load %arg6[%c0_24, %c0_25] : memref<32x128xf32, #tpu.memory_space<vmem>>, vector<32x128xf32>
      %55 = vector.shape_cast %54 : vector<32x128xf32> to vector<1x32x128xf32>
      %cst_26 = arith.constant dense<0.000000e+00> : vector<1xf32>
      %56 = vector.multi_reduction <add>, %55, %cst_26 [1, 2] : vector<1x32x128xf32> to vector<1xf32>
      %57 = vector.shape_cast %56 : vector<1xf32> to vector<1x1x1xf32>
      %58 = vector.extract %57[0, 0, 0] : f32 from vector<1x1x1xf32>
      %cst_27 = arith.constant -1.562500e-02 : f32
      %59 = arith.mulf %58, %cst_27 : f32
      %60 = tpu.iota {dimensions = array<i32: 0>} : vector<8x128xi32>
      %61 = tpu.iota {dimensions = array<i32: 1>} : vector<8x128xi32>
      %c0_i32_28 = arith.constant 0 : i32
      %62 = vector.broadcast %c0_i32_28 : i32 to vector<8x128xi32>
      %63 = arith.cmpi eq, %60, %62 : vector<8x128xi32>
      %c0_i32_29 = arith.constant 0 : i32
      %64 = vector.broadcast %c0_i32_29 : i32 to vector<8x128xi32>
      %65 = arith.cmpi eq, %61, %64 : vector<8x128xi32>
      %66 = arith.andi %63, %65 : vector<8x128xi1>
      %cst_30 = arith.constant 0.000000e+00 : f32
      %67 = vector.broadcast %59 : f32 to vector<8x128xf32>
      %68 = vector.broadcast %cst_30 : f32 to vector<8x128xf32>
      %69 = arith.select %66, %67, %68 : vector<8x128xi1>, vector<8x128xf32>
      %c0_31 = arith.constant 0 : index
      %c0_32 = arith.constant 0 : index
      %70 = vector.load %arg5[%c0_31, %c0_32] : memref<8x128xf32, #tpu.memory_space<vmem>>, vector<8x128xf32>
      tpu.vector_store %arg5[%c0_31, %c0_32], %69 {strides = array<i32>} : memref<8x128xf32, #tpu.memory_space<vmem>>, vector<8x128xf32>,
    } else {
    }
    return
  }
  func.func @transform_0(%arg0: i32, %arg1: i32, %arg2: memref<9xf32, #tpu.memory_space<smem>>) -> (i32, i32) {
    %c1_i32 = arith.constant 1 : i32
    %0 = arith.muli %arg0, %c1_i32 : i32
    %1 = arith.addi %0, %arg1 : i32
    %c0_i32 = arith.constant 0 : i32
    %c0_i32_0 = arith.constant 0 : i32
    return %1, %c0_i32 : i32, i32
  }
  func.func @transform_1(%arg0: i32, %arg1: i32, %arg2: memref<9xf32, #tpu.memory_space<smem>>) -> (i32, i32) {
    %c1_i32 = arith.constant 1 : i32
    %0 = arith.muli %arg0, %c1_i32 : i32
    %1 = arith.addi %0, %arg1 : i32
    %c0_i32 = arith.constant 0 : i32
    %c0_i32_0 = arith.constant 0 : i32
    return %1, %c0_i32 : i32, i32
  }
  func.func @transform_2(%arg0: i32, %arg1: i32, %arg2: memref<9xf32, #tpu.memory_space<smem>>) -> (i32, i32) {
    %c0_i32 = arith.constant 0 : i32
    %c0_i32_0 = arith.constant 0 : i32
    return %arg0, %c0_i32 : i32, i32
  }
}

</mosaic_0001>

<llo_original>
// kernel: tpu_custom_call.1
$region0: #{tpu_custom_call.1}
  #allocation0 [shape = 'u32[]', space=smem, size = 0x4, offset = 0x4, fixed_abs, tag = 'smem constant byte address 0x4 - core index']
  #allocation1 [shape = 'u32[144,128]{1,0:T(1,128)}', space=vmem, size = 0x12000, scoped, tag = 'internal scratch']
  #allocation2 [shape = 'f32[32,128]{1,0:T(8,128)}', space=vmem, size = 0x4000, scoped, tag = 'scratch operand']
  #allocation3 [shape = 's32[1]{0}', space=sflag, size = 0x4, scoped, tag = 'scoped memory for tpu_custom_call.1']
  #allocation4 [shape = 'u8[512]{0}', space=smem, size = 0x200, scoped, tag = 'prefetched SMEM operand 0']
  %s0 = inlined_call_operand.hbm [shape: f32[9], index: 0, kind: input, shape index: {}]
  %s1 = inlined_call_operand.hbm [shape: f32[32,128], index: 1, kind: input, shape index: {}]
  %s2 = inlined_call_operand.hbm [shape: s8[32,128], index: 2, kind: input, shape index: {}]
  %s3 = inlined_call_operand.hbm [shape: f32[8,128], index: 3, kind: output, shape index: {}]
  %s4 = sld [smem:[#allocation0]]
  $region42: #{tpu_custom_call.1} parent=0
    _
  %s6 = ssub.s32 1, %s4
  %s7 = scalar_select 0, %s6, %s4
  %9 = dma.hbm_to_smem %s0, 16, [#allocation4], [#allocation3]
  %10 = dma.done [#allocation3], 16
  %11 = sfence
  $region1: #{tpu_custom_call.1} parent=0
    #allocation5 [shape = 'u8[16384]{0}', space=vmem, size = 0x4000, scoped, tag = 'input window, operand 1, single buffered']
    #allocation6 [shape = 's32[1]{0}', space=sflag, size = 0x4, scoped, tag = 'scoped memory for tpu_custom_call.1']
    #allocation7 [shape = 's32[1]{0}', space=sflag, size = 0x4, scoped, tag = 'scoped memory for tpu_custom_call.1']
    #allocation8 [shape = 'u8[4096]{0}', space=vmem, size = 0x1000, scoped, tag = 'input window, operand 2, single buffered']
    #allocation9 [shape = 's32[1]{0}', space=sflag, size = 0x4, scoped, tag = 'scoped memory for tpu_custom_call.1']
    #allocation10 [shape = 'u8[4096]{0}', space=vmem, size = 0x1000, scoped, tag = 'output window, operand 0, single buffered']
    %12 = vsyncpa [#allocation6], 0
    %13 = vsyncpa [#allocation9], 0
    %14 = vsyncpa [#allocation7], 0
    // Predicated region
    $region2: #{tpu_custom_call.1} parent=1 // pred_check
      _
    $region3: #{tpu_custom_call.1} parent=1 // pred_check_branch
      %16 = sbr.rel (0) target = $region5
    $region4: #{tpu_custom_call.1} parent=1 // pred_region
      %s17 = sadd.s32 0, 0
      %s18 = smul.u32 4, %s17
      %s20 = ssub.s32 512, 512
      %21 = vsyncadd [#allocation6], %s20
      %s22 = smul.addr %s18, 128
      %s23 = scalar_lea.hbm %s1, %s22
      %s24 = sshll.u32 [#allocation5], 4
      %s25 = int_to_ptr.vmem [resolvable:$true] %s24
      %30 = dma.hbm_to_vmem [thread:$0]  %s23, 512, %s25, [#allocation6], 128, 128, 8
    $region5: #{tpu_custom_call.1} parent=1 // pred_fallthru
      _
    // Predicated region
    $region6: #{tpu_custom_call.1} parent=1 // pred_check
      _
    $region7: #{tpu_custom_call.1} parent=1 // pred_check_branch
      %32 = sbr.rel (0) target = $region9
    $region8: #{tpu_custom_call.1} parent=1 // pred_region
      %s33 = sadd.s32 0, 0
      %s35 = ssub.s32 128, 128
      %36 = vsyncadd [#allocation9], %s35
      %s37 = smul.addr %s33, 128
      %s38 = scalar_lea.hbm %s2, %s37
      %s40 = sshll.u32 [#allocation8], 4
      %s41 = int_to_ptr.vmem [resolvable:$true] %s40
      %43 = dma.hbm_to_vmem [thread:$0]  %s38, 128, %s41, [#allocation9]
    $region9: #{tpu_custom_call.1} parent=1 // pred_fallthru
      _
    // Predicated region
    $region10: #{tpu_custom_call.1} parent=1 // pred_check
      _
    $region11: #{tpu_custom_call.1} parent=1 // pred_check_branch
      %45 = sbr.rel (0) target = $region13
    $region12: #{tpu_custom_call.1} parent=1 // pred_region
      %46 = dma.done [#allocation6], 512
    $region13: #{tpu_custom_call.1} parent=1 // pred_fallthru
      _
    // Predicated region
    $region14: #{tpu_custom_call.1} parent=1 // pred_check
      _
    $region15: #{tpu_custom_call.1} parent=1 // pred_check_branch
      %48 = sbr.rel (0) target = $region17
    $region16: #{tpu_custom_call.1} parent=1 // pred_region
      %49 = dma.done [#allocation9], 128
    $region17: #{tpu_custom_call.1} parent=1 // pred_fallthru
      _
    %s50 = sadd.s32 0, 0
    %s51 = smul.u32 4, %s50
    %s52 = sadd.s32 0, 0
    %p53 = scmp.eq.s32.totalorder 0, 0
    // Predicated region
    $region18: #{tpu_custom_call.1} parent=1 // pred_check
      %p54 = pneg %p53
    $region19: #{tpu_custom_call.1} parent=1 // pred_check_branch
      %56 = sbr.rel (%p54) target = $region21
    $region20: #{tpu_custom_call.1} parent=1 // pred_region
      %57 = vst [vmem:[#allocation2] sm:$0xff] 0.0
      %58 = vst [vmem:[#allocation2 + $0x8] sm:$0xff] 0.0
      %59 = vst [vmem:[#allocation2 + $0x10] sm:$0xff] 0.0
      %60 = vst [vmem:[#allocation2 + $0x18] sm:$0xff] 0.0
    $region21: #{tpu_custom_call.1} parent=1 // pred_fallthru
      _
    %v61 = vld [vmem:[#allocation5] sm:$0xff]
    %v62 = vld [vmem:[#allocation5 + $0x8] sm:$0xff]
    %v63 = vld [vmem:[#allocation5 + $0x10] sm:$0xff]
    %v64 = vld [vmem:[#allocation5 + $0x18] sm:$0xff]
    %v65 = vld [vmem:[#allocation8] sm:$0xff]
    %v66 = vunpack.c.0.s8 %v65
    %v67 = vunpack.c.1.s8 %v65
    %v68 = vunpack.c.2.s8 %v65
    %v69 = vunpack.c.3.s8 %v65
    %v70 = vcvt.s32.f32 %v66
    %v71 = vcvt.s32.f32 %v67
    %v72 = vcvt.s32.f32 %v68
    %v73 = vcvt.s32.f32 %v69
    %v74 = vmul.f32 %v70, 3.333333
    %v75 = vmul.f32 %v71, 3.333333
    %v76 = vmul.f32 %v72, 3.333333
    %v77 = vmul.f32 %v73, 3.333333
    %vm78 = vcmp.eq.f32.partialorder %v70, 7.0
    %vm79 = vcmp.eq.f32.partialorder %v71, 7.0
    %vm80 = vcmp.eq.f32.partialorder %v72, 7.0
    %vm81 = vcmp.eq.f32.partialorder %v73, 7.0
    %v82 = vadd.f32 %v74, -10.0
    %v83 = vadd.f32 %v75, -10.0
    %v84 = vadd.f32 %v76, -10.0
    %v85 = vadd.f32 %v77, -10.0
    %v86 = vsel %vm78, 1e+09, %v82
    %v87 = vsel %vm79, 1e+09, %v83
    %v88 = vsel %vm80, 1e+09, %v84
    %v89 = vsel %vm81, 1e+09, %v85
    %vm90 = vcmp.eq.f32.partialorder %v70, 0.0
    %vm91 = vcmp.eq.f32.partialorder %v71, 0.0
    %vm92 = vcmp.eq.f32.partialorder %v72, 0.0
    %vm93 = vcmp.eq.f32.partialorder %v73, 0.0
    %v94 = vadd.f32 %v74, -13.333333
    %v95 = vadd.f32 %v75, -13.333333
    %v96 = vadd.f32 %v76, -13.333333
    %v97 = vadd.f32 %v77, -13.333333
    %v98 = vsel %vm90, -1e+09, %v94
    %v99 = vsel %vm91, -1e+09, %v95
    %v100 = vsel %vm92, -1e+09, %v96
    %v101 = vsel %vm93, -1e+09, %v97
    %v102 = vsub.f32 %v61, %v86
    %v103 = vsub.f32 %v62, %v87
    %v104 = vsub.f32 %v63, %v88
    %v105 = vsub.f32 %v64, %v89
    %v106 = vmul.f32 %v102, 1.442695
    %v107 = vpow.pop %v106
    %v108 = vmul.f32 %v103, 1.442695
    %v109 = vpow.pop %v108
    %v110 = vmul.f32 %v104, 1.442695
    %v111 = vpow.pop %v110
    %v112 = vmul.f32 %v105, 1.442695
    %v113 = vpow.pop %v112
    %v114 = vadd.f32 %v107, 1.0
    %v115 = vadd.f32 %v109, 1.0
    %v116 = vadd.f32 %v111, 1.0
    %v117 = vadd.f32 %v113, 1.0
    %v118 = vrcp.pop %v114
    %v119 = vmul.f32 1.0, %v118
    %v120 = vrcp.pop %v115
    %v121 = vmul.f32 1.0, %v120
    %v122 = vrcp.pop %v116
    %v123 = vmul.f32 1.0, %v122
    %v124 = vrcp.pop %v117
    %v125 = vmul.f32 1.0, %v124
    %v126 = vsub.f32 %v61, %v98
    %v127 = vsub.f32 %v62, %v99
    %v128 = vsub.f32 %v63, %v100
    %v129 = vsub.f32 %v64, %v101
    %v130 = vmul.f32 %v126, 1.442695
    %v131 = vpow.pop %v130
    %v132 = vmul.f32 %v127, 1.442695
    %v133 = vpow.pop %v132
    %v134 = vmul.f32 %v128, 1.442695
    %v135 = vpow.pop %v134
    %v136 = vmul.f32 %v129, 1.442695
    %v137 = vpow.pop %v136
    %v138 = vadd.f32 %v131, 1.0
    %v139 = vadd.f32 %v133, 1.0
    %v140 = vadd.f32 %v135, 1.0
    %v141 = vadd.f32 %v137, 1.0
    %v142 = vrcp.pop %v138
    %v143 = vmul.f32 1.0, %v142
    %v144 = vrcp.pop %v139
    %v145 = vmul.f32 1.0, %v144
    %v146 = vrcp.pop %v140
    %v147 = vmul.f32 1.0, %v146
    %v148 = vrcp.pop %v141
    %v149 = vmul.f32 1.0, %v148
    %v150 = vsub.f32 %v119, %v143
    %v151 = vsub.f32 %v121, %v145
    %v152 = vsub.f32 %v123, %v147
    %v153 = vsub.f32 %v125, %v149
    %v154 = vmax.f32 %v150, 1e-15
    %v155 = vmax.f32 %v151, 1e-15
    %v156 = vmax.f32 %v152, 1e-15
    %v157 = vmax.f32 %v153, 1e-15
    %v158 = vmin.f32 %v154, 1.0
    %v159 = vmin.f32 %v155, 1.0
    %v160 = vmin.f32 %v156, 1.0
    %v161 = vmin.f32 %v157, 1.0
    %v162 = vlog2.pop %v158
    %v163 = vmul.f32 %v162, 0.6931472
    %v164 = vlog2.pop %v159
    %v165 = vmul.f32 %v164, 0.6931472
    %v166 = vlog2.pop %v160
    %v167 = vmul.f32 %v166, 0.6931472
    %v168 = vlog2.pop %v161
    %v169 = vmul.f32 %v168, 0.6931472
    %s170 = sadd.s32 0, 0
    %s171 = smul.u32 %s170, 4096
    %s172 = sadd.s32 %s171, 4096
    %p173 = scmp.le.s32.totalorder %s172, 64
    // Predicated region
    $region22: #{tpu_custom_call.1} parent=1 // pred_check
      %p174 = pneg %p173
    $region23: #{tpu_custom_call.1} parent=1 // pred_check_branch
      %176 = sbr.rel (%p174) target = $region25
    $region24: #{tpu_custom_call.1} parent=1 // pred_region
      %v177 = vld [vmem:[#allocation2] sm:$0xff]
      %v178 = vld [vmem:[#allocation2 + $0x8] sm:$0xff]
      %v179 = vld [vmem:[#allocation2 + $0x10] sm:$0xff]
      %v180 = vld [vmem:[#allocation2 + $0x18] sm:$0xff]
      %v181 = vadd.f32 %v177, %v163
      %v182 = vadd.f32 %v178, %v165
      %v183 = vadd.f32 %v179, %v167
      %v184 = vadd.f32 %v180, %v169
      %185 = vst [vmem:[#allocation2] sm:$0xff] %v181
      %186 = vst [vmem:[#allocation2 + $0x8] sm:$0xff] %v182
      %187 = vst [vmem:[#allocation2 + $0x10] sm:$0xff] %v183
      %188 = vst [vmem:[#allocation2 + $0x18] sm:$0xff] %v184
    $region25: #{tpu_custom_call.1} parent=1 // pred_fallthru
      _
    %p189 = scmp.lt.s32.totalorder %s171, 64
    %p190 = scmp.gt.s32.totalorder %s172, 64
    %p191 = pnand %p189, %p190
    %p192 = pneg %p191
    // Predicated region
    $region26: #{tpu_custom_call.1} parent=1 // pred_check
      _
    $region27: #{tpu_custom_call.1} parent=1 // pred_check_branch
      %194 = sbr.rel (%p191) target = $region29
    $region28: #{tpu_custom_call.1} parent=1 // pred_region
      %s195 = ssub.s32 64, %s171
      %v196 = vlaneseq
      %v197 = vshrl.u32 %v196, 7
      %v198 = vadd.s32 %v197, 8
      %v199 = vadd.s32 %v197, 16
      %v200 = vadd.s32 %v197, 24
      %v201 = vlaneseq
      %v202 = vand.u32 %v201, 127
      %v203 = vmul.u32 %v197, 128
      %v204 = vmul.u32 %v198, 128
      %v205 = vmul.u32 %v199, 128
      %v206 = vmul.u32 %v200, 128
      %v207 = vadd.s32 %v203, %v202
      %v208 = vadd.s32 %v204, %v202
      %v209 = vadd.s32 %v205, %v202
      %v210 = vadd.s32 %v206, %v202
      %v211 = vld [vmem:[#allocation2] sm:$0xff]
      %v212 = vld [vmem:[#allocation2 + $0x8] sm:$0xff]
      %v213 = vld [vmem:[#allocation2 + $0x10] sm:$0xff]
      %v214 = vld [vmem:[#allocation2 + $0x18] sm:$0xff]
      %v215 = vstv %s195
      %vm216 = vcmp.lt.s32.totalorder %v207, %v215
      %vm217 = vcmp.lt.s32.totalorder %v208, %v215
      %vm218 = vcmp.lt.s32.totalorder %v209, %v215
      %vm219 = vcmp.lt.s32.totalorder %v210, %v215
      %v220 = vsel %vm216, %v163, 0.0
      %v221 = vsel %vm217, %v165, 0.0
      %v222 = vsel %vm218, %v167, 0.0
      %v223 = vsel %vm219, %v169, 0.0
      %v224 = vadd.f32 %v211, %v220
      %v225 = vadd.f32 %v212, %v221
      %v226 = vadd.f32 %v213, %v222
      %v227 = vadd.f32 %v214, %v223
      %228 = vst [vmem:[#allocation2] sm:$0xff] %v224
      %229 = vst [vmem:[#allocation2 + $0x8] sm:$0xff] %v225
      %230 = vst [vmem:[#allocation2 + $0x10] sm:$0xff] %v226
      %231 = vst [vmem:[#allocation2 + $0x18] sm:$0xff] %v227
    $region29: #{tpu_custom_call.1} parent=1 // pred_fallthru
      _
    // Predicated region
    $region30: #{tpu_custom_call.1} parent=1 // pred_check
      %p232 = pneg %p53
    $region31: #{tpu_custom_call.1} parent=1 // pred_check_branch
      %234 = sbr.rel (%p232) target = $region33
    $region32: #{tpu_custom_call.1} parent=1 // pred_region
      %v235 = vld [vmem:[#allocation2] sm:$0xff]
      %v236 = vld [vmem:[#allocation2 + $0x8] sm:$0xff]
      %v237 = vld [vmem:[#allocation2 + $0x10] sm:$0xff]
      %v238 = vld [vmem:[#allocation2 + $0x18] sm:$0xff]
      %v239 = vadd.f32 %v235, %v236
      %v240 = vadd.f32 %v239, %v237
      %v241 = vadd.f32 %v240, %v238
      %242 = vadd.xlane.f32.xlu0 %v241
      %v243 = vpop.xlane.xlu0 %242
      %v244 = vrot.slane %v243, 4
      %v245 = vadd.f32 %v243, %v244
      %v246 = vrot.slane %v245, 2
      %v247 = vadd.f32 %v245, %v246
      %v248 = vrot.slane %v247, 1
      %v249 = vadd.f32 %v247, %v248
      %s250 = vtos %v249
      %s251 = smul.f32 %s250, -0.015625
      %v252 = vlaneseq
      %v253 = vshrl.u32 %v252, 7
      %v254 = vlaneseq
      %v255 = vand.u32 %v254, 127
      %vm256 = vcmp.eq.s32.totalorder %v253, 0
      %vm257 = vcmp.eq.s32.totalorder %v255, 0
      %vm258 = vmand %vm256, %vm257
      %v259 = vstv %s251
      %v260 = vsel %vm258, %v259, 0.0
      %261 = vst [vmem:[#allocation10] sm:$0xff] %v260
    $region33: #{tpu_custom_call.1} parent=1 // pred_fallthru
      _
    // Predicated region
    $region34: #{tpu_custom_call.1} parent=1 // pred_check
      _
    $region35: #{tpu_custom_call.1} parent=1 // pred_check_branch
      %263 = sbr.rel (0) target = $region37
    $region36: #{tpu_custom_call.1} parent=1 // pred_region
      %s265 = ssub.s32 128, 128
      %266 = vsyncadd [#allocation7], %s265
      %s268 = sshll.u32 [#allocation10], 4
      %s269 = int_to_ptr.vmem [resolvable:$true] %s268
      %271 = dma.vmem_to_hbm [thread:$0]  %s269, 128, %s3, [#allocation7]
    $region37: #{tpu_custom_call.1} parent=1 // pred_fallthru
      _
    // Predicated region
    $region38: #{tpu_custom_call.1} parent=1 // pred_check
      _
    $region39: #{tpu_custom_call.1} parent=1 // pred_check_branch
      %273 = sbr.rel (0) target = $region41
    $region40: #{tpu_custom_call.1} parent=1 // pred_region
      %274 = dma.done [#allocation7], 128
    $region41: #{tpu_custom_call.1} parent=1 // pred_fallthru
      _
    %275 = vsyncpa [#allocation6], 1
    %276 = vsyncpa [#allocation9], 1
    %277 = vsyncpa [#allocation7], 1

</llo_original>
